<compile_context>
chip_gen: v5e
topology: v5e:2x2
jax: 0.10.0
libtpu: 0.0.40
codegen_flags: <defaults>
</compile_context>

<pallas_src>
import functools

import jax
import jax.numpy as jnp
from jax import lax
from jax.experimental import pallas as pl
from jax.experimental.pallas import tpu as pltpu


def _joints_mse_kernel(pred_ref, gt_ref, w2_ref, out_ref, *,
                       rows_total, row_tile, chunk, n_chunks):
    """One grid step: weighted SSE over one tile of heatmap rows."""
    i = pl.program_id(0)

    def chunk_rowsums(c):
        # When n_chunks > 1, chunk is a multiple of 128, so c*chunk is 128-aligned.
        start = pl.multiple_of(c * chunk, 128) if n_chunks > 1 else 0
        p = pred_ref[:, pl.ds(start, chunk)].astype(jnp.float32)
        g = gt_ref[:, pl.ds(start, chunk)].astype(jnp.float32)
        d = p - g
        return jnp.sum(d * d, axis=1, keepdims=True)            # (row_tile, 1)

    if n_chunks == 1:
        ss = chunk_rowsums(0)
    else:
        # Lane-chunked reduction: bounds f32 temporaries to (row_tile, chunk).
        ss = lax.fori_loop(
            0, n_chunks,
            lambda c, acc: acc + chunk_rowsums(c),
            jnp.zeros((row_tile, 1), jnp.float32),
            unroll=(n_chunks <= 8))

    # Mask tail rows of the last (possibly partial) block.  The mask is a
    # select applied AFTER the per-row reduction, so OOB garbage (even NaN/Inf)
    # stays confined to the dead rows and cannot leak.
    row_ids = i * row_tile + lax.broadcasted_iota(jnp.int32, ss.shape, 0)
    per_row = jnp.where(row_ids < rows_total, ss * w2_ref[...], 0.0)

    partial = jnp.sum(per_row)                                   # scalar
    # Replicate into a layout-friendly (1, 8, 128) output tile (negligible bytes).
    out_ref[...] = jnp.broadcast_to(partial, out_ref.shape).astype(jnp.float32)


def _vmem_capacity_bytes():
    """Per-core VMEM capacity; falls back to the v7x-safe 64 MiB."""
    try:
        info = pltpu.get_tpu_info()
        cap = getattr(info, "vmem_capacity_bytes", None)
        if cap:
            return int(cap)
    except Exception:
        pass
    return 64 << 20


def _choose_chunk(hw):
    """Lane-chunk width for the in-kernel reduction (bounds f32 temporaries)."""
    if hw > 512 and hw % 128 == 0:
        cw = max(c for c in range(128, 513, 128) if hw % c == 0)
        return cw, hw // cw
    return hw, 1                                   # single chunk == whole row


def _choose_row_tile(n_rows, hw, itemsize, chunk, input_budget,
                     temp_budget=6 << 20):
    """Largest sublane-rounded row tile that fits BOTH the double-buffered
    pred+gt input stream and ~4 live (row_tile, chunk) f32 temporaries, capped
    so the grid has >= 2 blocks whenever possible (v7x megacore split)."""
    sub = max(8, 32 // max(int(itemsize), 1))      # f32 -> 8, bf16 -> 16, int8 -> 32
    t_in = input_budget // max(2 * 2 * hw * int(itemsize), 1)   # 2 inputs x 2 buffers
    t_tmp = temp_budget // max(4 * chunk * 4, 1)                # ~4 live f32 temps
    tile = max(sub, (min(t_in, t_tmp) // sub) * sub)
    half = -(-n_rows // 2)                          # cdiv(R, 2)
    half = -(-half // sub) * sub                    # round up to sublane multiple
    rows_padded = -(-n_rows // sub) * sub
    tile = min(tile, max(half, sub))                # >= 2 blocks when R > sublane
    return int(min(tile, rows_padded))


def joints_mse_loss(output, target, target_weight, use_target_weight=True,
                    row_tile=None):
    """output/target: (B, J, H, W); target_weight: (B, J, 1) (or (B, J))."""
    assert output.shape == target.shape
    B, J, H, W = output.shape
    HW = H * W
    R = B * J

    # Free reshapes, native dtype (no HBM upcast copies).
    pred = output.reshape(R, HW)
    gt = target.reshape(R, HW)
    if use_target_weight:
        w = target_weight.reshape(R, 1).astype(jnp.float32)
        w2 = w * w                                  # (w*d)^2 == w^2 * d^2
    else:
        w2 = jnp.ones((R, 1), jnp.float32)

    itemsize = int(jnp.dtype(pred.dtype).itemsize)
    chunk, n_chunks = _choose_chunk(HW)

    # Per-chip VMEM budgets: v7x ~64 MiB/TC, v5e/v6e 128 MiB.  Fallback is the
    # v7x-safe small profile, so a failed query can never over-commit VMEM.
    vmem_cap = _vmem_capacity_bytes()
    input_budget = min(max((vmem_cap * 2) // 5, 8 << 20), 48 << 20)
    vmem_limit = int(min((vmem_cap * 3) // 4, 96 << 20))

    if row_tile is None:
        row_tile = _choose_row_tile(R, HW, itemsize, chunk, input_budget)
    n_blocks = pl.cdiv(R, row_tile)

    cost = pl.CostEstimate(
        flops=3 * R * HW,
        transcendentals=0,
        bytes_accessed=2 * R * HW * itemsize + R * 4 + n_blocks * 8 * 128 * 4,
    )

    kernel = functools.partial(
        _joints_mse_kernel, rows_total=R, row_tile=row_tile,
        chunk=chunk, n_chunks=n_chunks)

    partials = pl.pallas_call(
        kernel,
        out_shape=jax.ShapeDtypeStruct((n_blocks, 8, 128), jnp.float32),
        grid_spec=pltpu.PrefetchScalarGridSpec(
            num_scalar_prefetch=0,
            grid=(n_blocks,),
            in_specs=[
                pl.BlockSpec((row_tile, HW), lambda i: (i, 0)),
                pl.BlockSpec((row_tile, HW), lambda i: (i, 0)),
                pl.BlockSpec((row_tile, 1), lambda i: (i, 0)),
            ],
            out_specs=pl.BlockSpec((1, 8, 128), lambda i: (i, 0, 0)),
        ),
        compiler_params=pltpu.CompilerParams(
            dimension_semantics=("parallel",),      # v7x: shard blocks over 2 TCs
            vmem_limit_bytes=vmem_limit,
        ),
        cost_estimate=cost,
    )(pred, gt, w2)

    # Each block's partial is replicated across its (8,128) tile; take one copy.
    scale = jnp.float32(0.5 / (HW * J))
    return jnp.sum(partials[:, 0, 0]) * scale


def _reference(output, target, target_weight, use_target_weight=True):
    B, J, H, W = output.shape
    diff = output.astype(jnp.float32) - target.astype(jnp.float32)
    if use_target_weight:
        w = target_weight.reshape(B, J, 1, 1).astype(jnp.float32)
        diff = diff * w
    per = 0.5 * jnp.mean(diff * diff, axis=(2, 3))  # (B, J)
    return jnp.sum(per) / J


if __name__ == "__main__":
    key = jax.random.PRNGKey(0)
    B, J, H, W = 2, 4, 16, 16
    k1, k2, k3 = jax.random.split(key, 3)
    output = jax.random.normal(k1, (B, J, H, W), dtype=jnp.float32)
    target = jax.random.normal(k2, (B, J, H, W), dtype=jnp.float32)
    target_weight = jax.random.uniform(k3, (B, J, 1), dtype=jnp.float32)

    # f32 path, auto tile (HW=256 -> single lane chunk).
    loss = jax.block_until_ready(joints_mse_loss(output, target, target_weight, True))
    ref = _reference(output, target, target_weight, True)
    assert jnp.allclose(loss, ref, rtol=1e-5, atol=1e-6), (loss, ref)

    # bf16 inputs streamed natively (no wrapper upcast copy).
    out_bf16 = output.astype(jnp.bfloat16)
    tgt_bf16 = target.astype(jnp.bfloat16)
    loss_bf16 = jax.block_until_ready(
        joints_mse_loss(out_bf16, tgt_bf16, target_weight, True))
    ref_bf16 = _reference(out_bf16.astype(jnp.float32), tgt_bf16.astype(jnp.float32),
                          target_weight, True)
    assert jnp.allclose(loss_bf16, ref_bf16, rtol=1e-5, atol=1e-5), (loss_bf16, ref_bf16)

    # Lane-chunked reduction path (HW=1024 -> chunk=512, 2 chunks) with a
    # partial tail block (R=15, forced 8-row tile -> 2 blocks, no jnp.pad).
    B2, J2, H2, W2 = 3, 5, 32, 32
    k4, k5, k6 = jax.random.split(jax.random.PRNGKey(1), 3)
    out2 = jax.random.normal(k4, (B2, J2, H2, W2), dtype=jnp.float32)
    tgt2 = jax.random.normal(k5, (B2, J2, H2, W2), dtype=jnp.float32)
    tw2 = jax.random.uniform(k6, (B2, J2, 1), dtype=jnp.float32)
    loss2 = jax.block_until_ready(joints_mse_loss(out2, tgt2, tw2, True, row_tile=8))
    ref2 = _reference(out2, tgt2, tw2, True)
    assert jnp.allclose(loss2, ref2, rtol=1e-5, atol=1e-5), (loss2, ref2)

    # Same chunked shape with automatic tiling (>=2 blocks chosen automatically).
    loss2b = jax.block_until_ready(joints_mse_loss(out2, tgt2, tw2, True))
    assert jnp.allclose(loss2b, ref2, rtol=1e-5, atol=1e-5), (loss2b, ref2)

    # use_target_weight=False path.
    loss3 = jax.block_until_ready(joints_mse_loss(output, target, target_weight, False))
    ref3 = _reference(output, target, target_weight, False)
    assert jnp.allclose(loss3, ref3, rtol=1e-5, atol=1e-6), (loss3, ref3)

    print("KERNEL_OK")
</pallas_src>

<mosaic_0001>
module attributes {stable_mosaic.version = 11 : i64} {
  func.func @_joints_mse_kernel(%arg0: i32, %arg1: memref<8x256xf32, #tpu.memory_space<vmem>>, %arg2: memref<8x256xf32, #tpu.memory_space<vmem>>, %arg3: memref<8x1xf32, #tpu.memory_space<vmem>>, %arg4: memref<1x8x128xf32, #tpu.memory_space<vmem>>) attributes {dimension_semantics = [#tpu.dimension_semantics<parallel>], iteration_bounds = array<i64: 1>, scalar_prefetch = 0 : i64, scratch_operands = 0 : i64, tpu.core_type = #tpu.core_type<tc>, window_params = [{transform_indices = @transform_0, window_bounds = array<i64: 8, 256>}, {transform_indices = @transform_1, window_bounds = array<i64: 8, 256>}, {transform_indices = @transform_2, window_bounds = array<i64: 8, 1>}, {transform_indices = @transform_3, window_bounds = array<i64: 1, 8, 128>}]} {
    %c0 = arith.constant 0 : index
    %c0_0 = arith.constant 0 : index
    %0 = vector.load %arg1[%c0, %c0_0] : memref<8x256xf32, #tpu.memory_space<vmem>>, vector<8x256xf32>
    %c0_1 = arith.constant 0 : index
    %c0_2 = arith.constant 0 : index
    %1 = vector.load %arg2[%c0_1, %c0_2] : memref<8x256xf32, #tpu.memory_space<vmem>>, vector<8x256xf32>
    %2 = arith.subf %0, %1 : vector<8x256xf32>
    %3 = arith.mulf %2, %2 : vector<8x256xf32>
    %cst = arith.constant dense<0.000000e+00> : vector<8xf32>
    %4 = vector.multi_reduction <add>, %3, %cst [1] : vector<8x256xf32> to vector<8xf32>
    %5 = vector.shape_cast %4 : vector<8xf32> to vector<8x1xf32>
    %c8_i32 = arith.constant 8 : i32
    %6 = arith.muli %arg0, %c8_i32 : i32
    %7 = tpu.iota {dimensions = array<i32: 0>} : vector<8x1xi32>
    %8 = vector.broadcast %6 : i32 to vector<8x1xi32>
    %9 = arith.addi %8, %7 : vector<8x1xi32>
    %c8_i32_3 = arith.constant 8 : i32
    %10 = vector.broadcast %c8_i32_3 : i32 to vector<8x1xi32>
    %11 = arith.cmpi slt, %9, %10 : vector<8x1xi32>
    %c0_4 = arith.constant 0 : index
    %c0_5 = arith.constant 0 : index
    %12 = vector.load %arg3[%c0_4, %c0_5] : memref<8x1xf32, #tpu.memory_space<vmem>>, vector<8x1xf32>
    %13 = arith.mulf %5, %12 : vector<8x1xf32>
    %cst_6 = arith.constant 0.000000e+00 : f32
    %14 = vector.broadcast %cst_6 : f32 to vector<8x1xf32>
    %15 = arith.select %11, %13, %14 : vector<8x1xi1>, vector<8x1xf32>
    %16 = vector.shape_cast %15 : vector<8x1xf32> to vector<1x8x1xf32>
    %cst_7 = arith.constant dense<0.000000e+00> : vector<1xf32>
    %17 = vector.multi_reduction <add>, %16, %cst_7 [1, 2] : vector<1x8x1xf32> to vector<1xf32>
    %18 = vector.shape_cast %17 : vector<1xf32> to vector<1x1x1xf32>
    %19 = vector.extract %18[0, 0, 0] : f32 from vector<1x1x1xf32>
    %20 = vector.broadcast %19 : f32 to vector<1x8x128xf32>
    %c0_8 = arith.constant 0 : index
    %c0_9 = arith.constant 0 : index
    %c0_10 = arith.constant 0 : index
    %21 = vector.load %arg4[%c0_8, %c0_9, %c0_10] : memref<1x8x128xf32, #tpu.memory_space<vmem>>, vector<1x8x128xf32>
    tpu.vector_store %arg4[%c0_8, %c0_9, %c0_10], %20 {strides = array<i32>} : memref<1x8x128xf32, #tpu.memory_space<vmem>>, vector<1x8x128xf32>,
    return
  }
  func.func @transform_0(%arg0: i32) -> (i32, i32) {
    %c0_i32 = arith.constant 0 : i32
    %c0_i32_0 = arith.constant 0 : i32
    return %arg0, %c0_i32 : i32, i32
  }
  func.func @transform_1(%arg0: i32) -> (i32, i32) {
    %c0_i32 = arith.constant 0 : i32
    %c0_i32_0 = arith.constant 0 : i32
    return %arg0, %c0_i32 : i32, i32
  }
  func.func @transform_2(%arg0: i32) -> (i32, i32) {
    %c0_i32 = arith.constant 0 : i32
    %c0_i32_0 = arith.constant 0 : i32
    return %arg0, %c0_i32 : i32, i32
  }
  func.func @transform_3(%arg0: i32) -> (i32, i32, i32) {
    %c0_i32 = arith.constant 0 : i32
    %c0_i32_0 = arith.constant 0 : i32
    %c0_i32_1 = arith.constant 0 : i32
    return %arg0, %c0_i32, %c0_i32_0 : i32, i32, i32
  }
}

</mosaic_0001>

<llo_original>
// kernel: tpu_custom_call.1
$region0: #{tpu_custom_call.1}
  #allocation0 [shape = 'u32[]', space=smem, size = 0x4, offset = 0x4, fixed_abs, tag = 'smem constant byte address 0x4 - core index']
  #allocation1 [shape = 'u32[72,128]{1,0:T(1,128)}', space=vmem, size = 0x9000, scoped, tag = 'internal scratch']
  %s0 = inlined_call_operand.hbm [shape: f32[8,256], index: 0, kind: input, shape index: {}]
  %s1 = inlined_call_operand.hbm [shape: f32[8,256], index: 1, kind: input, shape index: {}]
  %s2 = inlined_call_operand.vmem [shape: f32[8,1], index: 2, kind: input, shape index: {}]
  %s3 = inlined_call_operand.hbm [shape: f32[1,8,128], index: 3, kind: output, shape index: {}]
  %s4 = sld [smem:[#allocation0]]
  $region30: #{tpu_custom_call.1} parent=0
    _
  %s6 = ssub.s32 1, %s4
  %s7 = scalar_select 0, %s6, %s4
  $region1: #{tpu_custom_call.1} parent=0
    #allocation2 [shape = 'u8[8192]{0}', space=vmem, size = 0x2000, scoped, tag = 'input window, operand 0, single buffered']
    #allocation3 [shape = 's32[1]{0}', space=sflag, size = 0x4, scoped, tag = 'scoped memory for tpu_custom_call.1']
    #allocation4 [shape = 's32[1]{0}', space=sflag, size = 0x4, scoped, tag = 'scoped memory for tpu_custom_call.1']
    #allocation5 [shape = 'u8[8192]{0}', space=vmem, size = 0x2000, scoped, tag = 'input window, operand 1, single buffered']
    #allocation6 [shape = 's32[1]{0}', space=sflag, size = 0x4, scoped, tag = 'scoped memory for tpu_custom_call.1']
    #allocation7 [shape = 'u8[4096]{0}', space=vmem, size = 0x1000, scoped, tag = 'output window, operand 0, single buffered']
    %8 = vsyncpa [#allocation3], 0
    %9 = vsyncpa [#allocation6], 0
    %10 = vsyncpa [#allocation4], 0
    // Predicated region
    $region2: #{tpu_custom_call.1} parent=1 // pred_check
      _
    $region3: #{tpu_custom_call.1} parent=1 // pred_check_branch
      %12 = sbr.rel (0) target = $region5
    $region4: #{tpu_custom_call.1} parent=1 // pred_region
      %14 = vsyncadd [#allocation3], 0
      %s16 = sshll.u32 %s0, 4
      %s17 = int_to_ptr.hbm [resolvable:$true] %s16
      %s18 = sshll.u32 [#allocation2], 4
      %s19 = int_to_ptr.vmem [resolvable:$true] %s18
      %21 = dma.hbm_to_vmem [thread:$0]  %s17, 256, %s19, [#allocation3]
    $region5: #{tpu_custom_call.1} parent=1 // pred_fallthru
      _
    // Predicated region
    $region6: #{tpu_custom_call.1} parent=1 // pred_check
      _
    $region7: #{tpu_custom_call.1} parent=1 // pred_check_branch
      %23 = sbr.rel (0) target = $region9
    $region8: #{tpu_custom_call.1} parent=1 // pred_region
      %25 = vsyncadd [#allocation6], 0
      %s27 = sshll.u32 %s1, 4
      %s28 = int_to_ptr.hbm [resolvable:$true] %s27
      %s29 = sshll.u32 [#allocation5], 4
      %s30 = int_to_ptr.vmem [resolvable:$true] %s29
      %32 = dma.hbm_to_vmem [thread:$0]  %s28, 256, %s30, [#allocation6]
    $region9: #{tpu_custom_call.1} parent=1 // pred_fallthru
      _
    // Predicated region
    $region10: #{tpu_custom_call.1} parent=1 // pred_check
      _
    $region11: #{tpu_custom_call.1} parent=1 // pred_check_branch
      %34 = sbr.rel (0) target = $region13
    $region12: #{tpu_custom_call.1} parent=1 // pred_region
      _
    $region13: #{tpu_custom_call.1} parent=1 // pred_fallthru
      _
    // Predicated region
    $region14: #{tpu_custom_call.1} parent=1 // pred_check
      _
    $region15: #{tpu_custom_call.1} parent=1 // pred_check_branch
      %36 = sbr.rel (0) target = $region17
    $region16: #{tpu_custom_call.1} parent=1 // pred_region
      %38 = dma.done [#allocation3], 256
    $region17: #{tpu_custom_call.1} parent=1 // pred_fallthru
      _
    // Predicated region
    $region18: #{tpu_custom_call.1} parent=1 // pred_check
      _
    $region19: #{tpu_custom_call.1} parent=1 // pred_check_branch
      %40 = sbr.rel (0) target = $region21
    $region20: #{tpu_custom_call.1} parent=1 // pred_region
      %42 = dma.done [#allocation6], 256
    $region21: #{tpu_custom_call.1} parent=1 // pred_fallthru
      _
    %v43 = vld [vmem:[#allocation2] sm:$0xff]
    %v44 = vld [vmem:[#allocation2 + $0x8] sm:$0xff]
    %v45 = vld [vmem:[#allocation5] sm:$0xff]
    %v46 = vld [vmem:[#allocation5 + $0x8] sm:$0xff]
    %v47 = vsub.f32 %v43, %v45
    %v48 = vsub.f32 %v44, %v46
    %v49 = vmul.f32 %v47, %v47
    %v50 = vmul.f32 %v48, %v48
    %v51 = vadd.f32 %v49, %v50
    %52 = vadd.xlane.f32.xlu0 %v51
    %v53 = vpop.xlane.xlu0 %52
    %s54 = smul.u32 0, 8
    %v55 = vlaneseq
    %v56 = vshrl.u32 %v55, 7
    %v57 = vstv %s54
    %v58 = vadd.s32 %v57, %v56
    %vm59 = vcmp.lt.s32.totalorder %v58, 8
    %v60 = vld [vmem:[%s2] sm:$0xff]
    %v61 = vmul.f32 %v53, %v60
    %v62 = vsel %vm59, %v61, 0.0
    %vm63 = vcmask 7168
    %v64 = vsel %vm63, %v62, 0.0
    %65 = vadd.xlane.f32.xlu0 %v64
    %v66 = vpop.xlane.xlu0 %65
    %v67 = vrot.slane %v66, 4
    %v68 = vadd.f32 %v66, %v67
    %v69 = vrot.slane %v68, 2
    %v70 = vadd.f32 %v68, %v69
    %v71 = vrot.slane %v70, 1
    %v72 = vadd.f32 %v70, %v71
    %s73 = vtos %v72
    %v74 = vstv %s73
    %75 = vst [vmem:[#allocation7] sm:$0xff] %v74
    // Predicated region
    $region22: #{tpu_custom_call.1} parent=1 // pred_check
      _
    $region23: #{tpu_custom_call.1} parent=1 // pred_check_branch
      %77 = sbr.rel (0) target = $region25
    $region24: #{tpu_custom_call.1} parent=1 // pred_region
      %79 = vsyncadd [#allocation4], 0
      %s81 = sshll.u32 [#allocation7], 4
      %s82 = int_to_ptr.vmem [resolvable:$true] %s81
      %s83 = sshll.u32 %s3, 4
      %s84 = int_to_ptr.hbm [resolvable:$true] %s83
      %86 = dma.vmem_to_hbm [thread:$0]  %s82, 128, %s84, [#allocation4]
    $region25: #{tpu_custom_call.1} parent=1 // pred_fallthru
      _
    // Predicated region
    $region26: #{tpu_custom_call.1} parent=1 // pred_check
      _
    $region27: #{tpu_custom_call.1} parent=1 // pred_check_branch
      %88 = sbr.rel (0) target = $region29
    $region28: #{tpu_custom_call.1} parent=1 // pred_region
      %90 = dma.done [#allocation4], 128
    $region29: #{tpu_custom_call.1} parent=1 // pred_fallthru
      _
    %91 = vsyncpa [#allocation3], 1
    %92 = vsyncpa [#allocation6], 1
    %93 = vsyncpa [#allocation4], 1

</llo_original>
